<compile_context>
chip_gen: v5e
topology: v5e:2x2
jax: 0.10.0
libtpu: 0.0.40
codegen_flags: <defaults>
</compile_context>

<pallas_src>
import functools

import jax
import jax.numpy as jnp
from jax.experimental import pallas as pl
from jax.experimental.pallas import tpu as pltpu


def _fused_mlp_kernel(*refs, num_layers: int):
    """refs = (x_ref, w0, b0, w1, b1, ..., w_{L-1}, b_{L-1}, o_ref).

    One batch tile per grid step.  All (w, b) blocks have constant index maps
    so they are VMEM-resident; intermediate activations never touch HBM.
    """
    x_ref = refs[0]
    o_ref = refs[-1]
    wb_refs = refs[1:-1]

    h = x_ref[...]
    for layer in range(num_layers):
        w = wb_refs[2 * layer][...]
        b = wb_refs[2 * layer + 1][...]
        # MXU matmul with f32 accumulation; bias add + ReLU stay in f32
        # (v5e VPU/EUP have no bf16 support).
        y = jnp.dot(h.astype(w.dtype), w, preferred_element_type=jnp.float32)
        y = y + b
        if layer < num_layers - 1:
            y = jnp.maximum(y, 0.0)
        h = y
    o_ref[...] = h.astype(o_ref.dtype)


def _round_up(x: int, m: int) -> int:
    return -(-x // m) * m


def _pick_batch_tile(batch: int, requested):
    if requested is not None:
        return requested
    # Prefer the largest tile that divides the batch exactly (no padding);
    # otherwise fall back to a sublane-aligned (multiple-of-8) tile and pad.
    for cand in (1024, 512, 256, 128, 64, 32, 16, 8):
        if batch % cand == 0:
            return cand
    return min(1024, _round_up(batch, 8))


def mlp_forward(x, params, *, block_batch=None, use_bf16_operands=False):
    """Fused forward pass of Model(nodes).

    x:      (B, Din) float32
    params: list of (w, b) with w: (Din_l, Dout_l) float32 (pre-transposed),
            b: (Dout_l,) float32
    """
    B, Din = x.shape
    Dout = params[-1][0].shape[1]
    num_layers = len(params)

    tb = _pick_batch_tile(B, block_batch)
    Bp = _round_up(B, tb)
    grid = (Bp // tb,)

    compute_dtype = jnp.bfloat16 if use_bf16_operands else jnp.float32
    itemsize = jnp.dtype(compute_dtype).itemsize

    x_c = x.astype(compute_dtype)
    if Bp != B:
        x_c = jnp.pad(x_c, ((0, Bp - B), (0, 0)))

    # x tile walks the batch; weights/biases are whole-array & VMEM-resident.
    in_specs = [pl.BlockSpec((tb, Din), lambda i: (i, 0))]
    flat_args = [x_c]
    resident_bytes = 0
    for w, b in params:
        din, dout = w.shape
        in_specs.append(pl.BlockSpec((din, dout), lambda i: (0, 0)))
        in_specs.append(pl.BlockSpec((1, dout), lambda i: (0, 0)))
        flat_args.append(w.astype(compute_dtype))
        flat_args.append(b.reshape(1, dout).astype(jnp.float32))
        # BlockSpec inputs are double-buffered even with a constant index_map.
        resident_bytes += 2 * (din * dout * itemsize + dout * 4)

    max_width = max([Din, Dout] + [w.shape[1] for w, _ in params])
    resident_bytes += 2 * tb * Din * itemsize          # x tiles (double-buffered)
    resident_bytes += 2 * tb * Dout * 4                # out tiles (double-buffered)
    resident_bytes += 2 * tb * max_width * 4           # live f32 activations headroom

    compiler_kwargs = dict(dimension_semantics=("parallel",))
    default_scoped_vmem = 32 << 20
    if resident_bytes > default_scoped_vmem:
        try:
            cap = pltpu.get_tpu_info().vmem_capacity_bytes
        except Exception:
            cap = 64 << 20  # conservative (v7x per-TC VMEM)
        compiler_kwargs["vmem_limit_bytes"] = int(min(resident_bytes * 1.25, cap))
        # TODO(synk): if the weights alone exceed VMEM capacity, tile Dout on a
        # grid axis and Din as a reduction axis with a VMEM accumulator +
        # pl.when init/finalize instead of keeping whole layers resident.

    flops = int(sum(2 * Bp * w.shape[0] * w.shape[1] for w, _ in params))
    bytes_accessed = int(
        Bp * Din * itemsize
        + sum(w.size * itemsize + b.size * 4 for w, b in params)
        + Bp * Dout * 4
    )

    kernel = functools.partial(_fused_mlp_kernel, num_layers=num_layers)
    out = pl.pallas_call(
        kernel,
        out_shape=jax.ShapeDtypeStruct((Bp, Dout), jnp.float32),
        grid_spec=pltpu.PrefetchScalarGridSpec(
            num_scalar_prefetch=0,
            grid=grid,
            in_specs=in_specs,
            out_specs=pl.BlockSpec((tb, Dout), lambda i: (i, 0)),
        ),
        compiler_params=pltpu.CompilerParams(**compiler_kwargs),
        cost_estimate=pl.CostEstimate(
            flops=flops, transcendentals=0, bytes_accessed=bytes_accessed
        ),
    )(*flat_args)

    if Bp != B:
        out = out[:B]
    return out


def init_params(nodes, key):
    """Deterministic params matching nn.Linear shapes (stored transposed)."""
    params = []
    for din, dout in zip(nodes, nodes[1:]):
        key, kw, kb = jax.random.split(key, 3)
        # Mimic PyTorch's default uniform(-1/sqrt(din), 1/sqrt(din)) init.
        bound = 1.0 / jnp.sqrt(jnp.float32(din))
        w = jax.random.uniform(kw, (din, dout), jnp.float32, -bound, bound)
        b = jax.random.uniform(kb, (dout,), jnp.float32, -bound, bound)
        params.append((w, b))
    return params


def mlp_reference(x, params):
    # Pure-JAX reference: ReLU on all but the last layer (matches Model.forward).
    for w, b in params[:-1]:
        x = jnp.maximum(x @ w + b, 0.0)
    w, b = params[-1]
    return x @ w + b


if __name__ == "__main__":
    nodes = [32, 64, 48, 16]   # Model(nodes=[32, 64, 48, 16])
    batch = 16                 # small; block_batch=8 exercises a 2-step grid

    key = jax.random.PRNGKey(0)
    key, kx = jax.random.split(key)
    x = jax.random.normal(kx, (batch, nodes[0]), jnp.float32)

    params = init_params(nodes, key)
    ref = mlp_reference(x, params)

    # f32 path (strict correctness), explicit 2-step batch grid.
    out = mlp_forward(x, params, block_batch=8, use_bf16_operands=False)
    out = jax.block_until_ready(out)
    assert out.shape == (batch, nodes[-1])
    assert jnp.allclose(out, ref, atol=1e-4, rtol=1e-5)

    # Ragged batch (exercises the pad-and-slice path) with bf16 MXU operands
    # (f32 accumulate / epilogue) — the MXU-peak dtype on v6e/v7x.
    xr = x[:11]
    out_bf16 = mlp_forward(xr, params, use_bf16_operands=True)
    out_bf16 = jax.block_until_ready(out_bf16)
    assert out_bf16.shape == (11, nodes[-1])
    assert jnp.allclose(out_bf16, ref[:11], atol=0.1, rtol=0.1)

    print("KERNEL_OK")
</pallas_src>

<mosaic_0001>
module attributes {stable_mosaic.version = 11 : i64} {
  func.func @_fused_mlp_kernel(%arg0: i32, %arg1: memref<8x32xf32, #tpu.memory_space<vmem>>, %arg2: memref<32x64xf32, #tpu.memory_space<vmem>>, %arg3: memref<1x64xf32, #tpu.memory_space<vmem>>, %arg4: memref<64x48xf32, #tpu.memory_space<vmem>>, %arg5: memref<1x48xf32, #tpu.memory_space<vmem>>, %arg6: memref<48x16xf32, #tpu.memory_space<vmem>>, %arg7: memref<1x16xf32, #tpu.memory_space<vmem>>, %arg8: memref<8x16xf32, #tpu.memory_space<vmem>>) attributes {dimension_semantics = [#tpu.dimension_semantics<parallel>], iteration_bounds = array<i64: 2>, scalar_prefetch = 0 : i64, scratch_operands = 0 : i64, tpu.core_type = #tpu.core_type<tc>, window_params = [{transform_indices = @transform_0, window_bounds = array<i64: 8, 32>}, {pipeline_mode = #tpu.pipeline_mode<synchronous>, transform_indices = @transform_1, window_bounds = array<i64: 32, 64>}, {pipeline_mode = #tpu.pipeline_mode<synchronous>, transform_indices = @transform_2, window_bounds = array<i64: 1, 64>}, {pipeline_mode = #tpu.pipeline_mode<synchronous>, transform_indices = @transform_3, window_bounds = array<i64: 64, 48>}, {pipeline_mode = #tpu.pipeline_mode<synchronous>, transform_indices = @transform_4, window_bounds = array<i64: 1, 48>}, {pipeline_mode = #tpu.pipeline_mode<synchronous>, transform_indices = @transform_5, window_bounds = array<i64: 48, 16>}, {pipeline_mode = #tpu.pipeline_mode<synchronous>, transform_indices = @transform_6, window_bounds = array<i64: 1, 16>}, {transform_indices = @transform_7, window_bounds = array<i64: 8, 16>}]} {
    %c0 = arith.constant 0 : index
    %c0_0 = arith.constant 0 : index
    %0 = vector.load %arg1[%c0, %c0_0] : memref<8x32xf32, #tpu.memory_space<vmem>>, vector<8x32xf32>
    %c0_1 = arith.constant 0 : index
    %c0_2 = arith.constant 0 : index
    %1 = vector.load %arg2[%c0_1, %c0_2] : memref<32x64xf32, #tpu.memory_space<vmem>>, vector<32x64xf32>
    %c0_3 = arith.constant 0 : index
    %c0_4 = arith.constant 0 : index
    %2 = vector.load %arg3[%c0_3, %c0_4] : memref<1x64xf32, #tpu.memory_space<vmem>>, vector<1x64xf32>
    %cst = arith.constant dense<0.000000e+00> : vector<8x64xf32>
    %3 = tpu.matmul %0, %1, %cst {dimension_numbers = #tpu.dot_dimension_numbers<[1], [0], [0], [1], [0, 0, 1, 1], [], []>} : vector<8x32xf32>, vector<32x64xf32>, vector<8x64xf32> -> vector<8x64xf32>
    %4 = vector.broadcast %2 : vector<1x64xf32> to vector<8x64xf32>
    %5 = arith.addf %3, %4 : vector<8x64xf32>
    %cst_5 = arith.constant 0.000000e+00 : f32
    %6 = vector.broadcast %cst_5 : f32 to vector<8x64xf32>
    %7 = arith.maximumf %5, %6 : vector<8x64xf32>
    %c0_6 = arith.constant 0 : index
    %c0_7 = arith.constant 0 : index
    %8 = vector.load %arg4[%c0_6, %c0_7] : memref<64x48xf32, #tpu.memory_space<vmem>>, vector<64x48xf32>
    %c0_8 = arith.constant 0 : index
    %c0_9 = arith.constant 0 : index
    %9 = vector.load %arg5[%c0_8, %c0_9] : memref<1x48xf32, #tpu.memory_space<vmem>>, vector<1x48xf32>
    %cst_10 = arith.constant dense<0.000000e+00> : vector<8x48xf32>
    %10 = tpu.matmul %7, %8, %cst_10 {dimension_numbers = #tpu.dot_dimension_numbers<[1], [0], [0], [1], [0, 0, 1, 1], [], []>} : vector<8x64xf32>, vector<64x48xf32>, vector<8x48xf32> -> vector<8x48xf32>
    %11 = vector.broadcast %9 : vector<1x48xf32> to vector<8x48xf32>
    %12 = arith.addf %10, %11 : vector<8x48xf32>
    %cst_11 = arith.constant 0.000000e+00 : f32
    %13 = vector.broadcast %cst_11 : f32 to vector<8x48xf32>
    %14 = arith.maximumf %12, %13 : vector<8x48xf32>
    %c0_12 = arith.constant 0 : index
    %c0_13 = arith.constant 0 : index
    %15 = vector.load %arg6[%c0_12, %c0_13] : memref<48x16xf32, #tpu.memory_space<vmem>>, vector<48x16xf32>
    %c0_14 = arith.constant 0 : index
    %c0_15 = arith.constant 0 : index
    %16 = vector.load %arg7[%c0_14, %c0_15] : memref<1x16xf32, #tpu.memory_space<vmem>>, vector<1x16xf32>
    %cst_16 = arith.constant dense<0.000000e+00> : vector<8x16xf32>
    %17 = tpu.matmul %14, %15, %cst_16 {dimension_numbers = #tpu.dot_dimension_numbers<[1], [0], [0], [1], [0, 0, 1, 1], [], []>} : vector<8x48xf32>, vector<48x16xf32>, vector<8x16xf32> -> vector<8x16xf32>
    %18 = vector.broadcast %16 : vector<1x16xf32> to vector<8x16xf32>
    %19 = arith.addf %17, %18 : vector<8x16xf32>
    %c0_17 = arith.constant 0 : index
    %c0_18 = arith.constant 0 : index
    %20 = vector.load %arg8[%c0_17, %c0_18] : memref<8x16xf32, #tpu.memory_space<vmem>>, vector<8x16xf32>
    tpu.vector_store %arg8[%c0_17, %c0_18], %19 {strides = array<i32>} : memref<8x16xf32, #tpu.memory_space<vmem>>, vector<8x16xf32>,
    return
  }
  func.func @transform_0(%arg0: i32) -> (i32, i32) {
    %c0_i32 = arith.constant 0 : i32
    %c0_i32_0 = arith.constant 0 : i32
    return %arg0, %c0_i32 : i32, i32
  }
  func.func @transform_1(%arg0: i32) -> (i32, i32) {
    %c0_i32 = arith.constant 0 : i32
    %c0_i32_0 = arith.constant 0 : i32
    %c0_i32_1 = arith.constant 0 : i32
    return %c0_i32, %c0_i32_0 : i32, i32
  }
  func.func @transform_2(%arg0: i32) -> (i32, i32) {
    %c0_i32 = arith.constant 0 : i32
    %c0_i32_0 = arith.constant 0 : i32
    %c0_i32_1 = arith.constant 0 : i32
    return %c0_i32, %c0_i32_0 : i32, i32
  }
  func.func @transform_3(%arg0: i32) -> (i32, i32) {
    %c0_i32 = arith.constant 0 : i32
    %c0_i32_0 = arith.constant 0 : i32
    %c0_i32_1 = arith.constant 0 : i32
    return %c0_i32, %c0_i32_0 : i32, i32
  }
  func.func @transform_4(%arg0: i32) -> (i32, i32) {
    %c0_i32 = arith.constant 0 : i32
    %c0_i32_0 = arith.constant 0 : i32
    %c0_i32_1 = arith.constant 0 : i32
    return %c0_i32, %c0_i32_0 : i32, i32
  }
  func.func @transform_5(%arg0: i32) -> (i32, i32) {
    %c0_i32 = arith.constant 0 : i32
    %c0_i32_0 = arith.constant 0 : i32
    %c0_i32_1 = arith.constant 0 : i32
    return %c0_i32, %c0_i32_0 : i32, i32
  }
  func.func @transform_6(%arg0: i32) -> (i32, i32) {
    %c0_i32 = arith.constant 0 : i32
    %c0_i32_0 = arith.constant 0 : i32
    %c0_i32_1 = arith.constant 0 : i32
    return %c0_i32, %c0_i32_0 : i32, i32
  }
  func.func @transform_7(%arg0: i32) -> (i32, i32) {
    %c0_i32 = arith.constant 0 : i32
    %c0_i32_0 = arith.constant 0 : i32
    return %arg0, %c0_i32 : i32, i32
  }
}

</mosaic_0001>

<llo_original>
// kernel: tpu_custom_call.1
$region0: #{tpu_custom_call.1}
  #allocation0 [shape = 'u32[]', space=smem, size = 0x4, offset = 0x4, fixed_abs, tag = 'smem constant byte address 0x4 - core index']
  #allocation1 [shape = 'u32[72,128]{1,0:T(1,128)}', space=vmem, size = 0x9000, scoped, tag = 'internal scratch']
  %s0 = inlined_call_operand.vmem [shape: f32[16,32], index: 0, kind: input, shape index: {}]
  %s1 = inlined_call_operand.vmem [shape: f32[32,64], index: 1, kind: input, shape index: {}]
  %s2 = inlined_call_operand.vmem [shape: f32[1,64], index: 2, kind: input, shape index: {}]
  %s3 = inlined_call_operand.vmem [shape: f32[64,48], index: 3, kind: input, shape index: {}]
  %s4 = inlined_call_operand.vmem [shape: f32[1,48], index: 4, kind: input, shape index: {}]
  %s5 = inlined_call_operand.vmem [shape: f32[48,16], index: 5, kind: input, shape index: {}]
  %s6 = inlined_call_operand.vmem [shape: f32[1,16], index: 6, kind: input, shape index: {}]
  %s7 = inlined_call_operand.hbm [shape: f32[16,16], index: 7, kind: output, shape index: {}]
  %s8 = sld [smem:[#allocation0]]
  $region61: #{tpu_custom_call.1} parent=0
    _
  %s10 = ssub.s32 1, %s8
  %s11 = scalar_select 0, %s10, %s8
  $region1: #{tpu_custom_call.1} parent=0
    #allocation2 [shape = 'u8[8192]{0}', space=vmem, size = 0x2000, scoped, tag = 'output window, operand 0']
    #allocation3 [shape = 's32[2]{0}', space=sflag, size = 0x8, scoped, tag = 'scoped memory for tpu_custom_call.1']
    %12 = vsyncpa [#allocation3], 0
    %s13 = scalar_lea.sflag [#allocation3], 1
    %14 = vsyncpa %s13, 0
    loop: start=0, step=1, limit=4
    $region2: #{tpu_custom_call.1} parent=1 // loop_pre_header
      _
    $region3: #{tpu_custom_call.1} parent=1 // loop_header
      %s16 = sphi 0, %s20
      %p17 = scmp.ge.s32.totalorder %s16, 4
      %s26 = sphi 0, %s28
      %s29 = sphi 0, %s26
      %s30 = sphi 0, %s29
      %s46 = sphi 0, %s30
      %s50 = sphi 0, %s50
      %s52 = sphi 0, %s50
      %s53 = sphi 0, %s52
      %s67 = sphi 0, %s53
      %s71 = sphi 0, %s71
      %s73 = sphi 0, %s71
      %s74 = sphi 0, %s73
      %s88 = sphi 0, %s74
      %s92 = sphi 0, %s92
      %s94 = sphi 0, %s92
      %s95 = sphi 0, %s94
      %s109 = sphi 0, %s95
      %s113 = sphi 0, %s113
      %s115 = sphi 0, %s113
      %s116 = sphi 0, %s115
      %s130 = sphi 0, %s116
      %s134 = sphi 0, %s134
      %s136 = sphi 0, %s134
      %s137 = sphi 0, %s136
      %s151 = sphi 0, %s137
      %s155 = sphi 0, %s155
      %s157 = sphi 0, %s155
      %s158 = sphi 0, %s157
      %s172 = sphi 0, %s158
      %s178 = sphi 0, %s180
      %s181 = sphi 0, %s178
      %s182 = sphi 0, %s181
      %s198 = sphi 0, %s182
    $region4: #{tpu_custom_call.1} parent=1 // loop_header_branch
      %19 = sbr.rel (%p17) target = $region8
    $region5: #{tpu_custom_call.1} parent=1 // loop_body
      %s21 = ssub.s32 %s16, 1
      %s22 = ssub.s32 %s16, 2
      %s23 = sadd.s32 %s16, 1
      %s24 = ssub.s32 %s16, %s23
      %p25 = scmp.eq.s32.totalorder %s24, 0
      %s27 = sadd.s32 %s26, 1
      %s28 = scalar_select %p25, %s26, %s27
      %p31 = pneg %p25
      %p32 = scmp.eq.s32.totalorder %s16, 1
      %p33 = por %p31, %p32
      %p34 = scmp.ne.s32.totalorder %s26, %s29
      %p35 = scmp.eq.s32.totalorder %s16, 0
      %p36 = por %p34, %p35
      %p37 = scmp.ne.s32.totalorder %s26, %s29
      %p38 = scmp.eq.s32.totalorder %s21, 1
      %p39 = por %p37, %p38
      %p40 = scmp.ne.s32.totalorder %s29, %s30
      %p41 = scmp.eq.s32.totalorder %s21, 0
      %p42 = por %p40, %p41
      %p43 = scmp.ne.s32.totalorder %s29, %s30
      %p44 = scmp.eq.s32.totalorder %s22, 1
      %p45 = por %p43, %p44
      %p47 = scmp.ne.s32.totalorder %s30, %s46
      %p48 = scmp.eq.s32.totalorder %s22, 0
      %p49 = por %p47, %p48
      %s51 = sadd.s32 %s50, 1
      %p54 = scmp.eq.s32.totalorder %s16, 1
      %p55 = scmp.ne.s32.totalorder %s50, %s52
      %p56 = scmp.eq.s32.totalorder %s16, 0
      %p57 = por %p55, %p56
      %p58 = scmp.ne.s32.totalorder %s50, %s52
      %p59 = scmp.eq.s32.totalorder %s21, 1
      %p60 = por %p58, %p59
      %p61 = scmp.ne.s32.totalorder %s52, %s53
      %p62 = scmp.eq.s32.totalorder %s21, 0
      %p63 = por %p61, %p62
      %p64 = scmp.ne.s32.totalorder %s52, %s53
      %p65 = scmp.eq.s32.totalorder %s22, 1
      %p66 = por %p64, %p65
      %p68 = scmp.ne.s32.totalorder %s53, %s67
      %p69 = scmp.eq.s32.totalorder %s22, 0
      %p70 = por %p68, %p69
      %s72 = sadd.s32 %s71, 1
      %p75 = scmp.eq.s32.totalorder %s16, 1
      %p76 = scmp.ne.s32.totalorder %s71, %s73
      %p77 = scmp.eq.s32.totalorder %s16, 0
      %p78 = por %p76, %p77
      %p79 = scmp.ne.s32.totalorder %s71, %s73
      %p80 = scmp.eq.s32.totalorder %s21, 1
      %p81 = por %p79, %p80
      %p82 = scmp.ne.s32.totalorder %s73, %s74
      %p83 = scmp.eq.s32.totalorder %s21, 0
      %p84 = por %p82, %p83
      %p85 = scmp.ne.s32.totalorder %s73, %s74
      %p86 = scmp.eq.s32.totalorder %s22, 1
      %p87 = por %p85, %p86
      %p89 = scmp.ne.s32.totalorder %s74, %s88
      %p90 = scmp.eq.s32.totalorder %s22, 0
      %p91 = por %p89, %p90
      %s93 = sadd.s32 %s92, 1
      %p96 = scmp.eq.s32.totalorder %s16, 1
      %p97 = scmp.ne.s32.totalorder %s92, %s94
      %p98 = scmp.eq.s32.totalorder %s16, 0
      %p99 = por %p97, %p98
      %p100 = scmp.ne.s32.totalorder %s92, %s94
      %p101 = scmp.eq.s32.totalorder %s21, 1
      %p102 = por %p100, %p101
      %p103 = scmp.ne.s32.totalorder %s94, %s95
      %p104 = scmp.eq.s32.totalorder %s21, 0
      %p105 = por %p103, %p104
      %p106 = scmp.ne.s32.totalorder %s94, %s95
      %p107 = scmp.eq.s32.totalorder %s22, 1
      %p108 = por %p106, %p107
      %p110 = scmp.ne.s32.totalorder %s95, %s109
      %p111 = scmp.eq.s32.totalorder %s22, 0
      %p112 = por %p110, %p111
      %s114 = sadd.s32 %s113, 1
      %p117 = scmp.eq.s32.totalorder %s16, 1
      %p118 = scmp.ne.s32.totalorder %s113, %s115
      %p119 = scmp.eq.s32.totalorder %s16, 0
      %p120 = por %p118, %p119
      %p121 = scmp.ne.s32.totalorder %s113, %s115
      %p122 = scmp.eq.s32.totalorder %s21, 1
      %p123 = por %p121, %p122
      %p124 = scmp.ne.s32.totalorder %s115, %s116
      %p125 = scmp.eq.s32.totalorder %s21, 0
      %p126 = por %p124, %p125
      %p127 = scmp.ne.s32.totalorder %s115, %s116
      %p128 = scmp.eq.s32.totalorder %s22, 1
      %p129 = por %p127, %p128
      %p131 = scmp.ne.s32.totalorder %s116, %s130
      %p132 = scmp.eq.s32.totalorder %s22, 0
      %p133 = por %p131, %p132
      %s135 = sadd.s32 %s134, 1
      %p138 = scmp.eq.s32.totalorder %s16, 1
      %p139 = scmp.ne.s32.totalorder %s134, %s136
      %p140 = scmp.eq.s32.totalorder %s16, 0
      %p141 = por %p139, %p140
      %p142 = scmp.ne.s32.totalorder %s134, %s136
      %p143 = scmp.eq.s32.totalorder %s21, 1
      %p144 = por %p142, %p143
      %p145 = scmp.ne.s32.totalorder %s136, %s137
      %p146 = scmp.eq.s32.totalorder %s21, 0
      %p147 = por %p145, %p146
      %p148 = scmp.ne.s32.totalorder %s136, %s137
      %p149 = scmp.eq.s32.totalorder %s22, 1
      %p150 = por %p148, %p149
      %p152 = scmp.ne.s32.totalorder %s137, %s151
      %p153 = scmp.eq.s32.totalorder %s22, 0
      %p154 = por %p152, %p153
      %s156 = sadd.s32 %s155, 1
      %p159 = scmp.eq.s32.totalorder %s16, 1
      %p160 = scmp.ne.s32.totalorder %s155, %s157
      %p161 = scmp.eq.s32.totalorder %s16, 0
      %p162 = por %p160, %p161
      %p163 = scmp.ne.s32.totalorder %s155, %s157
      %p164 = scmp.eq.s32.totalorder %s21, 1
      %p165 = por %p163, %p164
      %p166 = scmp.ne.s32.totalorder %s157, %s158
      %p167 = scmp.eq.s32.totalorder %s21, 0
      %p168 = por %p166, %p167
      %p169 = scmp.ne.s32.totalorder %s157, %s158
      %p170 = scmp.eq.s32.totalorder %s22, 1
      %p171 = por %p169, %p170
      %p173 = scmp.ne.s32.totalorder %s158, %s172
      %p174 = scmp.eq.s32.totalorder %s22, 0
      %p175 = por %p173, %p174
      %s176 = ssub.s32 %s16, %s23
      %p177 = scmp.eq.s32.totalorder %s176, 0
      %s179 = sadd.s32 %s178, 1
      %s180 = scalar_select %p177, %s178, %s179
      %p183 = pneg %p177
      %p184 = scmp.eq.s32.totalorder %s16, 1
      %p185 = por %p183, %p184
      %p186 = scmp.ne.s32.totalorder %s178, %s181
      %p187 = scmp.eq.s32.totalorder %s16, 0
      %p188 = por %p186, %p187
      %p189 = scmp.ne.s32.totalorder %s178, %s181
      %p190 = scmp.eq.s32.totalorder %s21, 1
      %p191 = por %p189, %p190
      %p192 = scmp.ne.s32.totalorder %s181, %s182
      %p193 = scmp.eq.s32.totalorder %s21, 0
      %p194 = por %p192, %p193
      %p195 = scmp.ne.s32.totalorder %s181, %s182
      %p196 = scmp.eq.s32.totalorder %s22, 1
      %p197 = por %p195, %p196
      %p199 = scmp.ne.s32.totalorder %s182, %s198
      %p200 = scmp.eq.s32.totalorder %s22, 0
      %p201 = por %p199, %p200
      %p202 = scmp.le.s32.totalorder 1, %s16
      %p203 = scmp.lt.s32.totalorder %s16, 3
      %p204 = pnand %p202, %p203
      %p205 = pneg %p204
      // Predicated region
      $region9: #{tpu_custom_call.1} parent=5 // pred_check
        _
      $region10: #{tpu_custom_call.1} parent=5 // pred_check_branch
        %207 = sbr.rel (%p204) target = $region12
      $region11: #{tpu_custom_call.1} parent=5 // pred_region
        %s208 = ssub.s32 %s16, 1
        // Predicated region
        $region13: #{tpu_custom_call.1} parent=11 // pred_check
          %p209 = pneg %p63
        $region14: #{tpu_custom_call.1} parent=11 // pred_check_branch
          %211 = sbr.rel (%p209) target = $region16
        $region15: #{tpu_custom_call.1} parent=11 // pred_region
          _
        $region16: #{tpu_custom_call.1} parent=11 // pred_fallthru
          _
        // Predicated region
        $region17: #{tpu_custom_call.1} parent=11 // pred_check
          %p212 = pneg %p84
        $region18: #{tpu_custom_call.1} parent=11 // pred_check_branch
          %214 = sbr.rel (%p212) target = $region20
        $region19: #{tpu_custom_call.1} parent=11 // pred_region
          _
        $region20: #{tpu_custom_call.1} parent=11 // pred_fallthru
          _
        // Predicated region
        $region21: #{tpu_custom_call.1} parent=11 // pred_check
          %p215 = pneg %p105
        $region22: #{tpu_custom_call.1} parent=11 // pred_check_branch
          %217 = sbr.rel (%p215) target = $region24
        $region23: #{tpu_custom_call.1} parent=11 // pred_region
          _
        $region24: #{tpu_custom_call.1} parent=11 // pred_fallthru
          _
        // Predicated region
        $region25: #{tpu_custom_call.1} parent=11 // pred_check
          %p218 = pneg %p126
        $region26: #{tpu_custom_call.1} parent=11 // pred_check_branch
          %220 = sbr.rel (%p218) target = $region28
        $region27: #{tpu_custom_call.1} parent=11 // pred_region
          _
        $region28: #{tpu_custom_call.1} parent=11 // pred_fallthru
          _
        // Predicated region
        $region29: #{tpu_custom_call.1} parent=11 // pred_check
          %p221 = pneg %p147
        $region30: #{tpu_custom_call.1} parent=11 // pred_check_branch
          %223 = sbr.rel (%p221) target = $region32
        $region31: #{tpu_custom_call.1} parent=11 // pred_region
          _
        $region32: #{tpu_custom_call.1} parent=11 // pred_fallthru
          _
        // Predicated region
        $region33: #{tpu_custom_call.1} parent=11 // pred_check
          %p224 = pneg %p168
        $region34: #{tpu_custom_call.1} parent=11 // pred_check_branch
          %226 = sbr.rel (%p224) target = $region36
        $region35: #{tpu_custom_call.1} parent=11 // pred_region
          _
        $region36: #{tpu_custom_call.1} parent=11 // pred_fallthru
          _
      $region12: #{tpu_custom_call.1} parent=5 // pred_fallthru
        _
      %p227 = scmp.lt.s32.totalorder %s16, 2
      // Predicated region
      $region37: #{tpu_custom_call.1} parent=5 // pred_check
        %p228 = pneg %p227
      $region38: #{tpu_custom_call.1} parent=5 // pred_check_branch
        %230 = sbr.rel (%p228) target = $region40
      $region39: #{tpu_custom_call.1} parent=5 // pred_region
        // Predicated region
        $region41: #{tpu_custom_call.1} parent=39 // pred_check
          %p231 = pneg %p36
        $region42: #{tpu_custom_call.1} parent=39 // pred_check_branch
          %233 = sbr.rel (%p231) target = $region44
        $region43: #{tpu_custom_call.1} parent=39 // pred_region
          %p234 = scmp.lt.s32.totalorder %s16, 1
          %s235 = scalar_select %p234, %s16, 1
          %s236 = smul.addr %s235, 8
          %s237 = scalar_lea.vmem %s0, %s236
        $region44: #{tpu_custom_call.1} parent=39 // pred_fallthru
          _
      $region40: #{tpu_custom_call.1} parent=5 // pred_fallthru
        _
      %p238 = scmp.le.s32.totalorder 1, %s16
      %p239 = scmp.lt.s32.totalorder %s16, 3
      %p240 = pnand %p238, %p239
      %p241 = pneg %p240
      // Predicated region
      $region45: #{tpu_custom_call.1} parent=5 // pred_check
        _
      $region46: #{tpu_custom_call.1} parent=5 // pred_check_branch
        %243 = sbr.rel (%p240) target = $region48
      $region47: #{tpu_custom_call.1} parent=5 // pred_region
        %s244 = ssub.s32 %s16, 1
        %p245 = scmp.lt.s32.totalorder %s21, 1
        %s246 = scalar_select %p245, %s21, 1
        %s247 = smul.addr %s246, 8
        %s248 = scalar_lea.vmem %s0, %s247
        %p249 = pneg %p42
        %p250 = pneg %p39
        %p251 = pneg %p63
        %p252 = pneg %p60
        %p253 = pneg %p84
        %p254 = pneg %p81
        %p255 = pneg %p105
        %p256 = pneg %p102
        %p257 = pneg %p126
        %p258 = pneg %p123
        %p259 = pneg %p147
        %p260 = pneg %p144
        %p261 = pneg %p168
        %p262 = pneg %p165
        %p263 = pneg %p194
        %p264 = pneg %p191
        %s265 = sand.u32 %s181, 1
        %s266 = scalar_lea.sflag [#allocation3], %s265
        %s267 = sand.u32 %s181, 1
        %s268 = smul.addr %s267, 8
        %s269 = scalar_lea.vmem [#allocation2], %s268
        %p270 = scmp.lt.s32.totalorder %s21, 1
        %s271 = scalar_select %p270, %s21, 1
        %s272 = smul.addr %s271, 8
        %s273 = scalar_lea.vmem %s0, %s272
        %v274 = vld [vmem:[%s273] sm:$0xff]
        %v275 = vld [vmem:[%s1] sm:$0xff]
        %v276 = vld [vmem:[%s1 + $0x8] sm:$0xff]
        %v277 = vld [vmem:[%s1 + $0x10] sm:$0xff]
        %v278 = vld [vmem:[%s1 + $0x18] sm:$0xff]
        %v279 = vld [vmem:[%s2] sm:$0x1]
        %v281 = vperm.slane %v279, 0
        %vm283 = vcmask 261120
        %v285 = vsel %vm283, %v274, 0
        %287 = vmatpush.msra.mxu0 0.0
        %288 = vmatpush.msra.mxu0 0.0
        %289 = vmatpush.msra.mxu0 0.0
        %290 = vmatpush.msra.mxu0 0.0
        %291 = vmatpush.msra.mxu0 0.0
        %292 = vmatpush.msra.mxu0 0.0
        %293 = vmatpush.msra.mxu0 0.0
        %294 = vmatpush.msra.mxu0 0.0
        %295 = vmatpush.msra.mxu0 0.0
        %296 = vmatpush.msra.mxu0 0.0
        %297 = vmatpush.msra.mxu0 0.0
        %298 = vmatpush.msra.mxu0 0.0
        %299 = vmatpush.msra.mxu0 %v278
        %300 = vmatpush.msra.mxu0 %v277
        %301 = vmatpush.msra.mxu0 %v276
        %302 = vmatpush.msra.mxu0 %v275
        %303 = vmatmul.f32.gmra.mxu0 %v285
        %v304 = vpop.f32.mrf.mxu0
        %v305 = vadd.f32 %v281, %v304
        %306 = vdwg.mxu0
        %v307 = vmax.f32 %v305, 0.0
        %v308 = vld [vmem:[%s3] sm:$0xff]
        %v309 = vld [vmem:[%s3 + $0x8] sm:$0xff]
        %v310 = vld [vmem:[%s3 + $0x10] sm:$0xff]
        %v311 = vld [vmem:[%s3 + $0x18] sm:$0xff]
        %v312 = vld [vmem:[%s3 + $0x20] sm:$0xff]
        %v313 = vld [vmem:[%s3 + $0x28] sm:$0xff]
        %v314 = vld [vmem:[%s3 + $0x30] sm:$0xff]
        %v315 = vld [vmem:[%s3 + $0x38] sm:$0xff]
        %v316 = vld [vmem:[%s4] sm:$0x1]
        %v318 = vperm.slane %v316, 0
        %vm320 = vcmask 523264
        %v322 = vsel %vm320, %v307, 0
        %324 = vmatpush.msra.mxu0 0.0
        %325 = vmatpush.msra.mxu0 0.0
        %326 = vmatpush.msra.mxu0 0.0
        %327 = vmatpush.msra.mxu0 0.0
        %328 = vmatpush.msra.mxu0 0.0
        %329 = vmatpush.msra.mxu0 0.0
        %330 = vmatpush.msra.mxu0 0.0
        %331 = vmatpush.msra.mxu0 0.0
        %332 = vmatpush.msra.mxu0 %v315
        %333 = vmatpush.msra.mxu0 %v314
        %334 = vmatpush.msra.mxu0 %v313
        %335 = vmatpush.msra.mxu0 %v312
        %336 = vmatpush.msra.mxu0 %v311
        %337 = vmatpush.msra.mxu0 %v310
        %338 = vmatpush.msra.mxu0 %v309
        %339 = vmatpush.msra.mxu0 %v308
        %340 = vmatmul.f32.gmra.mxu0 %v322
        %v341 = vpop.f32.mrf.mxu0
        %v342 = vadd.f32 %v318, %v341
        %343 = vdwg.mxu0
        %v344 = vmax.f32 %v342, 0.0
        %v345 = vld [vmem:[%s5] sm:$0xff]
        %v346 = vld [vmem:[%s5 + $0x8] sm:$0xff]
        %v347 = vld [vmem:[%s5 + $0x10] sm:$0xff]
        %v348 = vld [vmem:[%s5 + $0x18] sm:$0xff]
        %v349 = vld [vmem:[%s5 + $0x20] sm:$0xff]
        %v350 = vld [vmem:[%s5 + $0x28] sm:$0xff]
        %v351 = vld [vmem:[%s6] sm:$0x1]
        %v353 = vperm.slane %v351, 0
        %vm355 = vcmask 392192
        %v357 = vsel %vm355, %v344, 0
        %359 = vmatpush.msra.mxu0 0.0
        %360 = vmatpush.msra.mxu0 0.0
        %361 = vmatpush.msra.mxu0 0.0
        %362 = vmatpush.msra.mxu0 0.0
        %363 = vmatpush.msra.mxu0 0.0
        %364 = vmatpush.msra.mxu0 0.0
        %365 = vmatpush.msra.mxu0 0.0
        %366 = vmatpush.msra.mxu0 0.0
        %367 = vmatpush.msra.mxu0 0.0
        %368 = vmatpush.msra.mxu0 0.0
        %369 = vmatpush.msra.mxu0 %v350
        %370 = vmatpush.msra.mxu0 %v349
        %371 = vmatpush.msra.mxu0 %v348
        %372 = vmatpush.msra.mxu0 %v347
        %373 = vmatpush.msra.mxu0 %v346
        %374 = vmatpush.msra.mxu0 %v345
        %375 = vmatmul.f32.gmra.mxu0 %v357
        %v376 = vpop.f32.mrf.mxu0
        %v377 = vadd.f32 %v353, %v376
        %378 = vdwg.mxu0
        %vm379 = vcmask 130048
        %380 = vst.msk [vmem:[%s269] sm:$0xff] %vm379, %v377
        %s381 = sand.u32 %s181, 1
        %s382 = scalar_lea.sflag [#allocation3], %s381
        %s383 = sand.u32 %s181, 1
        %s384 = smul.addr %s383, 8
        %s385 = scalar_lea.vmem [#allocation2], %s384
        // Predicated region
        $region49: #{tpu_custom_call.1} parent=47 // pred_check
          %p386 = pneg %p191
        $region50: #{tpu_custom_call.1} parent=47 // pred_check_branch
          %388 = sbr.rel (%p386) target = $region52
        $region51: #{tpu_custom_call.1} parent=47 // pred_region
          %390 = vsyncadd %s382, 0
          %s391 = smul.addr %s21, 8
          %s392 = scalar_lea.hbm %s7, %s391
          %s394 = sshll.u32 %s385, 4
          %s395 = int_to_ptr.vmem [resolvable:$true] %s394
          %s396 = sshll.u32 %s392, 4
          %s397 = int_to_ptr.hbm [resolvable:$true] %s396
          %399 = dma.vmem_to_hbm [thread:$0]  %s395, 128, %s397, %s382
        $region52: #{tpu_custom_call.1} parent=47 // pred_fallthru
          _
      $region48: #{tpu_custom_call.1} parent=5 // pred_fallthru
        _
      %p400 = scmp.le.s32.totalorder 2, %s16
      // Predicated region
      $region53: #{tpu_custom_call.1} parent=5 // pred_check
        %p401 = pneg %p400
      $region54: #{tpu_custom_call.1} parent=5 // pred_check_branch
        %403 = sbr.rel (%p401) target = $region56
      $region55: #{tpu_custom_call.1} parent=5 // pred_region
        %s404 = ssub.s32 %s16, 2
        // Predicated region
        $region57: #{tpu_custom_call.1} parent=55 // pred_check
          %p405 = pneg %p197
        $region58: #{tpu_custom_call.1} parent=55 // pred_check_branch
          %407 = sbr.rel (%p405) target = $region60
        $region59: #{tpu_custom_call.1} parent=55 // pred_region
          %s408 = sand.u32 %s182, 1
          %s409 = scalar_lea.sflag [#allocation3], %s408
          %s410 = sand.u32 %s182, 1
          %s411 = smul.addr %s410, 8
          %s412 = scalar_lea.vmem [#allocation2], %s411
          %414 = dma.done %s409, 128
        $region60: #{tpu_custom_call.1} parent=55 // pred_fallthru
          _
      $region56: #{tpu_custom_call.1} parent=5 // pred_fallthru
        _
    $region6: #{tpu_custom_call.1} parent=1 // loop_footer
      %s20 = sadd.s32 1, %s16
    $region7: #{tpu_custom_call.1} parent=1 // loop_footer_branch
      %15 = sbr.rel target = $region3
    $region8: #{tpu_custom_call.1} parent=1 // loop_exit
      _
    %415 = vsyncpa [#allocation3], 1
    %s416 = scalar_lea.sflag [#allocation3], 1
    %417 = vsyncpa %s416, 1

</llo_original>
